<compile_context>
chip_gen: v5e
topology: v5e:2x2
jax: 0.10.0
libtpu: 0.0.40
codegen_flags: <defaults>
</compile_context>

<pallas_src>
import jax
import jax.numpy as jnp
from jax.experimental import pallas as pl
from jax.experimental.pallas import tpu as pltpu


def _output_block_kernel(w_ref, b_ref, x_ref, o_ref):
    # w_ref: SMEM (3*C,) f32, row-major w[o, c]     b_ref: SMEM (3,) f32
    # x_ref: VMEM (1, C, T) -- pixels on lanes      o_ref: VMEM (1, 3, T)
    C = x_ref.shape[1]
    x = x_ref[0]                                   # (C, T)
    rows = []
    for o in range(3):                             # 3 output channels (static unroll)
        acc = x[0:1, :] * w_ref[o * C + 0]         # (1, T) VPU scalar FMA chain
        for c in range(1, C):
            acc = acc + x[c:c + 1, :] * w_ref[o * C + c]
        rows.append(jnp.tanh(acc + b_ref[o]))      # tanh on EUP, f32
    o_ref[0] = jnp.concatenate(rows, axis=0).astype(o_ref.dtype)   # (3, T) lane-dense store


def _pick_tile(hw, c):
    """Largest lane-dense tile T that divides hw, under a conservative VMEM budget."""
    if hw % 128 != 0:
        return hw                      # full-extent block is always legal
    budget = 4 * 1024 * 1024           # bytes for double-buffered in+out (safe on v7x 64 MiB)
    bytes_per_px = (c + 8) * 4 * 2     # f32 input rows + (sublane-padded) output rows, x2 buffers
    cap = max(128, (budget // bytes_per_px) // 128 * 128)
    t = min(cap, hw)
    while hw % t != 0:                 # terminates at 128 (128 | hw)
        t -= 128
    return t


def output_block_pallas(x_nchw, weight, bias):
    """x_nchw: [B, C, H, W]; weight: [3, C] (PyTorch conv weight squeezed);
    bias: [3]. Returns [B, 3, H, W]."""
    B, C, H, W = x_nchw.shape
    HW = H * W

    x3 = x_nchw.reshape(B, C, HW)                          # free reshape, no transpose
    w_flat = weight.reshape(-1).astype(jnp.float32)        # (3*C,) row-major [o, c]
    b_flat = bias.reshape(-1).astype(jnp.float32)          # (3,)

    T = _pick_tile(HW, C)
    grid = (B, HW // T)

    out3 = pl.pallas_call(
        _output_block_kernel,
        out_shape=jax.ShapeDtypeStruct((B, 3, HW), x_nchw.dtype),
        grid=grid,
        in_specs=[
            pl.BlockSpec(memory_space=pltpu.MemorySpace.SMEM),   # weight scalars
            pl.BlockSpec(memory_space=pltpu.MemorySpace.SMEM),   # bias scalars
            pl.BlockSpec((1, C, T), lambda b, i: (b, 0, i)),     # activations, pixels on lanes
        ],
        out_specs=pl.BlockSpec((1, 3, T), lambda b, i: (b, 0, i)),
        compiler_params=pltpu.CompilerParams(
            dimension_semantics=("parallel", "parallel")),       # lets v7x's 2 TCs split the grid
    )(w_flat, b_flat, x3)

    return out3.reshape(B, 3, H, W)                        # free reshape, already NCHW


if __name__ == "__main__":
    B, C, H, W = 2, 4, 16, 16

    key = jax.random.PRNGKey(0)
    kx, kw, kb = jax.random.split(key, 3)

    x = jax.random.normal(kx, (B, C, H, W), dtype=jnp.float32)
    # Deterministic synthetic parameters (Conv2d(in=C, out=3, k=1) shapes).
    weight = jax.random.normal(kw, (3, C), dtype=jnp.float32) * 0.1   # [out=3, in=C]
    bias = jax.random.normal(kb, (3,), dtype=jnp.float32) * 0.1

    out = output_block_pallas(x, weight, bias)
    out = jax.block_until_ready(out)

    # Reference check (pure JAX): 1x1 conv == einsum over channel dim + bias, then tanh.
    ref = jnp.tanh(jnp.einsum("bchw,oc->bohw", x, weight) + bias[None, :, None, None])
    assert out.shape == (B, 3, H, W)
    assert jnp.allclose(out, ref, atol=1e-5, rtol=1e-5)

    print("KERNEL_OK")
</pallas_src>

<mosaic_0001>
module attributes {stable_mosaic.version = 11 : i64} {
  func.func @_output_block_kernel(%arg0: i32, %arg1: i32, %arg2: memref<12xf32, #tpu.memory_space<smem>>, %arg3: memref<3xf32, #tpu.memory_space<smem>>, %arg4: memref<1x4x256xf32, #tpu.memory_space<vmem>>, %arg5: memref<1x3x256xf32, #tpu.memory_space<vmem>>) attributes {dimension_semantics = [#tpu.dimension_semantics<parallel>, #tpu.dimension_semantics<parallel>], iteration_bounds = array<i64: 2, 1>, scalar_prefetch = 0 : i64, scratch_operands = 0 : i64, tpu.core_type = #tpu.core_type<tc>, window_params = [{transform_indices = @transform_0, window_bounds = array<i64: 12>}, {transform_indices = @transform_1, window_bounds = array<i64: 3>}, {transform_indices = @transform_2, window_bounds = array<i64: 1, 4, 256>}, {transform_indices = @transform_3, window_bounds = array<i64: 1, 3, 256>}]} {
    %c0 = arith.constant 0 : index
    %c0_0 = arith.constant 0 : index
    %c0_1 = arith.constant 0 : index
    %0 = vector.load %arg4[%c0, %c0_0, %c0_1] : memref<1x4x256xf32, #tpu.memory_space<vmem>>, vector<1x4x256xf32>
    %1 = vector.shape_cast %0 : vector<1x4x256xf32> to vector<4x256xf32>
    %2 = vector.extract_strided_slice %1 {offsets = [0, 0], sizes = [1, 256], strides = [1, 1]} : vector<4x256xf32> to vector<1x256xf32>
    %c0_2 = arith.constant 0 : index
    %3 = memref.load %arg2[%c0_2] : memref<12xf32, #tpu.memory_space<smem>>
    %4 = vector.broadcast %3 : f32 to vector<1x256xf32>
    %5 = arith.mulf %2, %4 : vector<1x256xf32>
    %6 = vector.extract_strided_slice %1 {offsets = [1, 0], sizes = [1, 256], strides = [1, 1]} : vector<4x256xf32> to vector<1x256xf32>
    %c1 = arith.constant 1 : index
    %7 = memref.load %arg2[%c1] : memref<12xf32, #tpu.memory_space<smem>>
    %8 = vector.broadcast %7 : f32 to vector<1x256xf32>
    %9 = arith.mulf %6, %8 : vector<1x256xf32>
    %10 = arith.addf %5, %9 : vector<1x256xf32>
    %11 = vector.extract_strided_slice %1 {offsets = [2, 0], sizes = [1, 256], strides = [1, 1]} : vector<4x256xf32> to vector<1x256xf32>
    %c2 = arith.constant 2 : index
    %12 = memref.load %arg2[%c2] : memref<12xf32, #tpu.memory_space<smem>>
    %13 = vector.broadcast %12 : f32 to vector<1x256xf32>
    %14 = arith.mulf %11, %13 : vector<1x256xf32>
    %15 = arith.addf %10, %14 : vector<1x256xf32>
    %16 = vector.extract_strided_slice %1 {offsets = [3, 0], sizes = [1, 256], strides = [1, 1]} : vector<4x256xf32> to vector<1x256xf32>
    %c3 = arith.constant 3 : index
    %17 = memref.load %arg2[%c3] : memref<12xf32, #tpu.memory_space<smem>>
    %18 = vector.broadcast %17 : f32 to vector<1x256xf32>
    %19 = arith.mulf %16, %18 : vector<1x256xf32>
    %20 = arith.addf %15, %19 : vector<1x256xf32>
    %c0_3 = arith.constant 0 : index
    %21 = memref.load %arg3[%c0_3] : memref<3xf32, #tpu.memory_space<smem>>
    %22 = vector.broadcast %21 : f32 to vector<1x256xf32>
    %23 = arith.addf %20, %22 : vector<1x256xf32>
    %24 = math.tanh %23 : vector<1x256xf32>
    %25 = vector.extract_strided_slice %1 {offsets = [0, 0], sizes = [1, 256], strides = [1, 1]} : vector<4x256xf32> to vector<1x256xf32>
    %c4 = arith.constant 4 : index
    %26 = memref.load %arg2[%c4] : memref<12xf32, #tpu.memory_space<smem>>
    %27 = vector.broadcast %26 : f32 to vector<1x256xf32>
    %28 = arith.mulf %25, %27 : vector<1x256xf32>
    %29 = vector.extract_strided_slice %1 {offsets = [1, 0], sizes = [1, 256], strides = [1, 1]} : vector<4x256xf32> to vector<1x256xf32>
    %c5 = arith.constant 5 : index
    %30 = memref.load %arg2[%c5] : memref<12xf32, #tpu.memory_space<smem>>
    %31 = vector.broadcast %30 : f32 to vector<1x256xf32>
    %32 = arith.mulf %29, %31 : vector<1x256xf32>
    %33 = arith.addf %28, %32 : vector<1x256xf32>
    %34 = vector.extract_strided_slice %1 {offsets = [2, 0], sizes = [1, 256], strides = [1, 1]} : vector<4x256xf32> to vector<1x256xf32>
    %c6 = arith.constant 6 : index
    %35 = memref.load %arg2[%c6] : memref<12xf32, #tpu.memory_space<smem>>
    %36 = vector.broadcast %35 : f32 to vector<1x256xf32>
    %37 = arith.mulf %34, %36 : vector<1x256xf32>
    %38 = arith.addf %33, %37 : vector<1x256xf32>
    %39 = vector.extract_strided_slice %1 {offsets = [3, 0], sizes = [1, 256], strides = [1, 1]} : vector<4x256xf32> to vector<1x256xf32>
    %c7 = arith.constant 7 : index
    %40 = memref.load %arg2[%c7] : memref<12xf32, #tpu.memory_space<smem>>
    %41 = vector.broadcast %40 : f32 to vector<1x256xf32>
    %42 = arith.mulf %39, %41 : vector<1x256xf32>
    %43 = arith.addf %38, %42 : vector<1x256xf32>
    %c1_4 = arith.constant 1 : index
    %44 = memref.load %arg3[%c1_4] : memref<3xf32, #tpu.memory_space<smem>>
    %45 = vector.broadcast %44 : f32 to vector<1x256xf32>
    %46 = arith.addf %43, %45 : vector<1x256xf32>
    %47 = math.tanh %46 : vector<1x256xf32>
    %48 = vector.extract_strided_slice %1 {offsets = [0, 0], sizes = [1, 256], strides = [1, 1]} : vector<4x256xf32> to vector<1x256xf32>
    %c8 = arith.constant 8 : index
    %49 = memref.load %arg2[%c8] : memref<12xf32, #tpu.memory_space<smem>>
    %50 = vector.broadcast %49 : f32 to vector<1x256xf32>
    %51 = arith.mulf %48, %50 : vector<1x256xf32>
    %52 = vector.extract_strided_slice %1 {offsets = [1, 0], sizes = [1, 256], strides = [1, 1]} : vector<4x256xf32> to vector<1x256xf32>
    %c9 = arith.constant 9 : index
    %53 = memref.load %arg2[%c9] : memref<12xf32, #tpu.memory_space<smem>>
    %54 = vector.broadcast %53 : f32 to vector<1x256xf32>
    %55 = arith.mulf %52, %54 : vector<1x256xf32>
    %56 = arith.addf %51, %55 : vector<1x256xf32>
    %57 = vector.extract_strided_slice %1 {offsets = [2, 0], sizes = [1, 256], strides = [1, 1]} : vector<4x256xf32> to vector<1x256xf32>
    %c10 = arith.constant 10 : index
    %58 = memref.load %arg2[%c10] : memref<12xf32, #tpu.memory_space<smem>>
    %59 = vector.broadcast %58 : f32 to vector<1x256xf32>
    %60 = arith.mulf %57, %59 : vector<1x256xf32>
    %61 = arith.addf %56, %60 : vector<1x256xf32>
    %62 = vector.extract_strided_slice %1 {offsets = [3, 0], sizes = [1, 256], strides = [1, 1]} : vector<4x256xf32> to vector<1x256xf32>
    %c11 = arith.constant 11 : index
    %63 = memref.load %arg2[%c11] : memref<12xf32, #tpu.memory_space<smem>>
    %64 = vector.broadcast %63 : f32 to vector<1x256xf32>
    %65 = arith.mulf %62, %64 : vector<1x256xf32>
    %66 = arith.addf %61, %65 : vector<1x256xf32>
    %c2_5 = arith.constant 2 : index
    %67 = memref.load %arg3[%c2_5] : memref<3xf32, #tpu.memory_space<smem>>
    %68 = vector.broadcast %67 : f32 to vector<1x256xf32>
    %69 = arith.addf %66, %68 : vector<1x256xf32>
    %70 = math.tanh %69 : vector<1x256xf32>
    %71 = tpu.concatenate %24, %47, %70 in 0 : vector<1x256xf32>, vector<1x256xf32>, vector<1x256xf32> -> vector<3x256xf32>
    %c0_6 = arith.constant 0 : index
    %c0_7 = arith.constant 0 : index
    %c0_8 = arith.constant 0 : index
    %72 = vector.load %arg5[%c0_6, %c0_7, %c0_8] : memref<1x3x256xf32, #tpu.memory_space<vmem>>, vector<1x3x256xf32>
    %73 = vector.shape_cast %72 : vector<1x3x256xf32> to vector<3x256xf32>
    %74 = vector.shape_cast %71 : vector<3x256xf32> to vector<1x3x256xf32>
    tpu.vector_store %arg5[%c0_6, %c0_7, %c0_8], %74 {strides = array<i32>} : memref<1x3x256xf32, #tpu.memory_space<vmem>>, vector<1x3x256xf32>,
    return
  }
  func.func @transform_0(%arg0: i32, %arg1: i32) -> i32 {
    %c0_i32 = arith.constant 0 : i32
    %c0_i32_0 = arith.constant 0 : i32
    return %c0_i32 : i32
  }
  func.func @transform_1(%arg0: i32, %arg1: i32) -> i32 {
    %c0_i32 = arith.constant 0 : i32
    %c0_i32_0 = arith.constant 0 : i32
    return %c0_i32 : i32
  }
  func.func @transform_2(%arg0: i32, %arg1: i32) -> (i32, i32, i32) {
    %c0_i32 = arith.constant 0 : i32
    %c0_i32_0 = arith.constant 0 : i32
    return %arg0, %c0_i32, %arg1 : i32, i32, i32
  }
  func.func @transform_3(%arg0: i32, %arg1: i32) -> (i32, i32, i32) {
    %c0_i32 = arith.constant 0 : i32
    %c0_i32_0 = arith.constant 0 : i32
    return %arg0, %c0_i32, %arg1 : i32, i32, i32
  }
}

</mosaic_0001>

<llo_original>
// kernel: tpu_custom_call.1
$region0: #{tpu_custom_call.1}
  #allocation0 [shape = 'u32[]', space=smem, size = 0x4, offset = 0x4, fixed_abs, tag = 'smem constant byte address 0x4 - core index']
  #allocation1 [shape = 'u32[72,128]{1,0:T(1,128)}', space=vmem, size = 0x9000, scoped, tag = 'internal scratch']
  %s0 = inlined_call_operand.hbm [shape: f32[12], index: 0, kind: input, shape index: {}]
  %s1 = inlined_call_operand.hbm [shape: f32[3], index: 1, kind: input, shape index: {}]
  %s2 = inlined_call_operand.hbm [shape: f32[2,4,256], index: 2, kind: input, shape index: {}]
  %s3 = inlined_call_operand.vmem [shape: f32[2,3,256], index: 3, kind: output, shape index: {}]
  %s4 = sld [smem:[#allocation0]]
  $region57: #{tpu_custom_call.1} parent=0
    _
  %s6 = ssub.s32 1, %s4
  %s7 = scalar_select 0, %s6, %s4
  $region1: #{tpu_custom_call.1} parent=0
    #allocation2 [shape = 'u8[512]{0}', space=smem, size = 0x200, scoped, tag = 'input window, operand 0, single buffered']
    #allocation3 [shape = 's32[2]{0}', space=sflag, size = 0x8, scoped, tag = 'scoped memory for tpu_custom_call.1']
    #allocation4 [shape = 's32[2]{0}', space=sflag, size = 0x8, scoped, tag = 'scoped memory for tpu_custom_call.1']
    #allocation5 [shape = 'u8[512]{0}', space=smem, size = 0x200, scoped, tag = 'input window, operand 1, single buffered']
    #allocation6 [shape = 's32[1]{0}', space=sflag, size = 0x4, scoped, tag = 'scoped memory for tpu_custom_call.1']
    #allocation7 [shape = 'u8[8192]{0}', space=vmem, size = 0x2000, scoped, tag = 'input window, operand 2']
    %8 = vsyncpa [#allocation4], 0
    %9 = vsyncpa [#allocation6], 0
    %10 = vsyncpa [#allocation3], 0
    %s11 = scalar_lea.sflag [#allocation3], 1
    %12 = vsyncpa %s11, 0
    loop: start=0, step=1, limit=4
    $region2: #{tpu_custom_call.1} parent=1 // loop_pre_header
      _
    $region3: #{tpu_custom_call.1} parent=1 // loop_header
      %s14 = sphi 0, %s18
      %p15 = scmp.ge.s32.totalorder %s14, 4
      %s21 = sphi 0, %s33
      %s22 = sphi 0, %s29
      %s23 = sphi 0, %s21
      %s24 = sphi 0, %s22
      %s25 = sphi 0, %s23
      %s26 = sphi 0, %s24
      %s34 = sphi 0, %s34
      %s36 = sphi 0, %s34
      %s37 = sphi 0, %s36
      %s51 = sphi 0, %s37
      %s55 = sphi 0, %s55
      %s57 = sphi 0, %s55
      %s58 = sphi 0, %s57
      %s72 = sphi 0, %s58
      %s80 = sphi 0, %s82
      %s83 = sphi 0, %s80
      %s84 = sphi 0, %s83
      %s100 = sphi 0, %s84
      %s108 = sphi 0, %s110
      %s111 = sphi 0, %s108
      %s112 = sphi 0, %s111
      %s128 = sphi 0, %s112
    $region4: #{tpu_custom_call.1} parent=1 // loop_header_branch
      %17 = sbr.rel (%p15) target = $region8
    $region5: #{tpu_custom_call.1} parent=1 // loop_body
      %s19 = ssub.s32 %s14, 1
      %s20 = ssub.s32 %s14, 2
      %s27 = sadd.s32 1, %s22
      %p28 = scmp.ge.s32.totalorder %s27, 1
      %s29 = scalar_select %p28, 0, %s27
      %s30 = sadd.s32 1, %s21
      %s31 = scalar_select %p28, %s30, %s21
      %p32 = scmp.ge.s32.totalorder %s31, 2
      %s33 = scalar_select %p32, 0, %s31
      %s35 = sadd.s32 %s34, 1
      %p38 = scmp.eq.s32.totalorder %s14, 1
      %p39 = scmp.ne.s32.totalorder %s34, %s36
      %p40 = scmp.eq.s32.totalorder %s14, 0
      %p41 = por %p39, %p40
      %p42 = scmp.ne.s32.totalorder %s34, %s36
      %p43 = scmp.eq.s32.totalorder %s19, 1
      %p44 = por %p42, %p43
      %p45 = scmp.ne.s32.totalorder %s36, %s37
      %p46 = scmp.eq.s32.totalorder %s19, 0
      %p47 = por %p45, %p46
      %p48 = scmp.ne.s32.totalorder %s36, %s37
      %p49 = scmp.eq.s32.totalorder %s20, 1
      %p50 = por %p48, %p49
      %p52 = scmp.ne.s32.totalorder %s37, %s51
      %p53 = scmp.eq.s32.totalorder %s20, 0
      %p54 = por %p52, %p53
      %s56 = sadd.s32 %s55, 1
      %p59 = scmp.eq.s32.totalorder %s14, 1
      %p60 = scmp.ne.s32.totalorder %s55, %s57
      %p61 = scmp.eq.s32.totalorder %s14, 0
      %p62 = por %p60, %p61
      %p63 = scmp.ne.s32.totalorder %s55, %s57
      %p64 = scmp.eq.s32.totalorder %s19, 1
      %p65 = por %p63, %p64
      %p66 = scmp.ne.s32.totalorder %s57, %s58
      %p67 = scmp.eq.s32.totalorder %s19, 0
      %p68 = por %p66, %p67
      %p69 = scmp.ne.s32.totalorder %s57, %s58
      %p70 = scmp.eq.s32.totalorder %s20, 1
      %p71 = por %p69, %p70
      %p73 = scmp.ne.s32.totalorder %s58, %s72
      %p74 = scmp.eq.s32.totalorder %s20, 0
      %p75 = por %p73, %p74
      %s76 = ssub.s32 %s21, %s33
      %s77 = ssub.s32 %s22, %s29
      %s78 = sor.u32 %s76, %s77
      %p79 = scmp.eq.s32.totalorder %s78, 0
      %s81 = sadd.s32 %s80, 1
      %s82 = scalar_select %p79, %s80, %s81
      %p85 = pneg %p79
      %p86 = scmp.eq.s32.totalorder %s14, 1
      %p87 = por %p85, %p86
      %p88 = scmp.ne.s32.totalorder %s80, %s83
      %p89 = scmp.eq.s32.totalorder %s14, 0
      %p90 = por %p88, %p89
      %p91 = scmp.ne.s32.totalorder %s80, %s83
      %p92 = scmp.eq.s32.totalorder %s19, 1
      %p93 = por %p91, %p92
      %p94 = scmp.ne.s32.totalorder %s83, %s84
      %p95 = scmp.eq.s32.totalorder %s19, 0
      %p96 = por %p94, %p95
      %p97 = scmp.ne.s32.totalorder %s83, %s84
      %p98 = scmp.eq.s32.totalorder %s20, 1
      %p99 = por %p97, %p98
      %p101 = scmp.ne.s32.totalorder %s84, %s100
      %p102 = scmp.eq.s32.totalorder %s20, 0
      %p103 = por %p101, %p102
      %s104 = ssub.s32 %s21, %s33
      %s105 = ssub.s32 %s22, %s29
      %s106 = sor.u32 %s104, %s105
      %p107 = scmp.eq.s32.totalorder %s106, 0
      %s109 = sadd.s32 %s108, 1
      %s110 = scalar_select %p107, %s108, %s109
      %p113 = pneg %p107
      %p114 = scmp.eq.s32.totalorder %s14, 1
      %p115 = por %p113, %p114
      %p116 = scmp.ne.s32.totalorder %s108, %s111
      %p117 = scmp.eq.s32.totalorder %s14, 0
      %p118 = por %p116, %p117
      %p119 = scmp.ne.s32.totalorder %s108, %s111
      %p120 = scmp.eq.s32.totalorder %s19, 1
      %p121 = por %p119, %p120
      %p122 = scmp.ne.s32.totalorder %s111, %s112
      %p123 = scmp.eq.s32.totalorder %s19, 0
      %p124 = por %p122, %p123
      %p125 = scmp.ne.s32.totalorder %s111, %s112
      %p126 = scmp.eq.s32.totalorder %s20, 1
      %p127 = por %p125, %p126
      %p129 = scmp.ne.s32.totalorder %s112, %s128
      %p130 = scmp.eq.s32.totalorder %s20, 0
      %p131 = por %p129, %p130
      %p132 = scmp.le.s32.totalorder 1, %s14
      %p133 = scmp.lt.s32.totalorder %s14, 3
      %p134 = pnand %p132, %p133
      %p135 = pneg %p134
      // Predicated region
      $region9: #{tpu_custom_call.1} parent=5 // pred_check
        _
      $region10: #{tpu_custom_call.1} parent=5 // pred_check_branch
        %137 = sbr.rel (%p134) target = $region12
      $region11: #{tpu_custom_call.1} parent=5 // pred_region
        %s138 = ssub.s32 %s14, 1
        // Predicated region
        $region13: #{tpu_custom_call.1} parent=11 // pred_check
          %p139 = pneg %p47
        $region14: #{tpu_custom_call.1} parent=11 // pred_check_branch
          %141 = sbr.rel (%p139) target = $region16
        $region15: #{tpu_custom_call.1} parent=11 // pred_region
          %143 = vsyncadd [#allocation4], 0
          %s145 = sshll.u32 %s0, 4
          %s146 = int_to_ptr.hbm [resolvable:$true] %s145
          %148 = dma.hbm_to_smem %s146, 16, [#allocation2], [#allocation4]
        $region16: #{tpu_custom_call.1} parent=11 // pred_fallthru
          _
        // Predicated region
        $region17: #{tpu_custom_call.1} parent=11 // pred_check
          %p149 = pneg %p68
        $region18: #{tpu_custom_call.1} parent=11 // pred_check_branch
          %151 = sbr.rel (%p149) target = $region20
        $region19: #{tpu_custom_call.1} parent=11 // pred_region
          %153 = vsyncadd [#allocation6], 0
          %s155 = sshll.u32 %s1, 4
          %s156 = int_to_ptr.hbm [resolvable:$true] %s155
          %158 = dma.hbm_to_smem %s156, 16, [#allocation5], [#allocation6]
        $region20: #{tpu_custom_call.1} parent=11 // pred_fallthru
          _
      $region12: #{tpu_custom_call.1} parent=5 // pred_fallthru
        _
      %p159 = scmp.lt.s32.totalorder %s14, 2
      // Predicated region
      $region21: #{tpu_custom_call.1} parent=5 // pred_check
        %p160 = pneg %p159
      $region22: #{tpu_custom_call.1} parent=5 // pred_check_branch
        %162 = sbr.rel (%p160) target = $region24
      $region23: #{tpu_custom_call.1} parent=5 // pred_region
        // Predicated region
        $region25: #{tpu_custom_call.1} parent=23 // pred_check
          %p163 = pneg %p90
        $region26: #{tpu_custom_call.1} parent=23 // pred_check_branch
          %165 = sbr.rel (%p163) target = $region28
        $region27: #{tpu_custom_call.1} parent=23 // pred_region
          %s166 = sand.u32 %s80, 1
          %s167 = scalar_lea.sflag [#allocation3], %s166
          %s168 = sand.u32 %s80, 1
          %s169 = smul.addr %s168, 8
          %s170 = scalar_lea.vmem [#allocation7], %s169
          %s171 = smul.u32 2, %s22
          %173 = vsyncadd %s167, 0
          %s174 = smul.addr %s21, 2
          %s175 = sadd.s32 %s171, %s174
          %s176 = smul.addr %s175, 4
          %s177 = scalar_lea.hbm %s2, %s176
          %s179 = sshll.u32 %s177, 4
          %s180 = int_to_ptr.hbm [resolvable:$true] %s179
          %s181 = sshll.u32 %s170, 4
          %s182 = int_to_ptr.vmem [resolvable:$true] %s181
          %184 = dma.hbm_to_vmem [thread:$0]  %s180, 128, %s182, %s167
        $region28: #{tpu_custom_call.1} parent=23 // pred_fallthru
          _
      $region24: #{tpu_custom_call.1} parent=5 // pred_fallthru
        _
      %p185 = scmp.le.s32.totalorder 1, %s14
      %p186 = scmp.lt.s32.totalorder %s14, 3
      %p187 = pnand %p185, %p186
      %p188 = pneg %p187
      // Predicated region
      $region29: #{tpu_custom_call.1} parent=5 // pred_check
        _
      $region30: #{tpu_custom_call.1} parent=5 // pred_check_branch
        %190 = sbr.rel (%p187) target = $region32
      $region31: #{tpu_custom_call.1} parent=5 // pred_region
        %s191 = ssub.s32 %s14, 1
        // Predicated region
        $region33: #{tpu_custom_call.1} parent=31 // pred_check
          %p192 = pneg %p47
        $region34: #{tpu_custom_call.1} parent=31 // pred_check_branch
          %194 = sbr.rel (%p192) target = $region36
        $region35: #{tpu_custom_call.1} parent=31 // pred_region
          %196 = dma.done [#allocation4], 16
        $region36: #{tpu_custom_call.1} parent=31 // pred_fallthru
          _
        // Predicated region
        $region37: #{tpu_custom_call.1} parent=31 // pred_check
          %p197 = pneg %p68
        $region38: #{tpu_custom_call.1} parent=31 // pred_check_branch
          %199 = sbr.rel (%p197) target = $region40
        $region39: #{tpu_custom_call.1} parent=31 // pred_region
          %201 = dma.done [#allocation6], 16
        $region40: #{tpu_custom_call.1} parent=31 // pred_fallthru
          _
        %s202 = sand.u32 %s83, 1
        %s203 = scalar_lea.sflag [#allocation3], %s202
        %s204 = sand.u32 %s83, 1
        %s205 = smul.addr %s204, 8
        %s206 = scalar_lea.vmem [#allocation7], %s205
        // Predicated region
        $region41: #{tpu_custom_call.1} parent=31 // pred_check
          %p207 = pneg %p96
        $region42: #{tpu_custom_call.1} parent=31 // pred_check_branch
          %209 = sbr.rel (%p207) target = $region44
        $region43: #{tpu_custom_call.1} parent=31 // pred_region
          %211 = dma.done %s203, 128
        $region44: #{tpu_custom_call.1} parent=31 // pred_fallthru
          _
        %212 = sfence
        %p213 = pneg %p47
        %p214 = pneg %p44
        %p215 = pneg %p68
        %p216 = pneg %p65
        %s217 = sand.u32 %s83, 1
        %s218 = scalar_lea.sflag [#allocation3], %s217
        %s219 = sand.u32 %s83, 1
        %s220 = smul.addr %s219, 8
        %s221 = scalar_lea.vmem [#allocation7], %s220
        %p222 = pneg %p96
        %p223 = pneg %p93
        %p224 = pneg %p124
        %p225 = pneg %p121
        %s226 = smul.u32 2, %s24
        %p227 = scmp.lt.s32.totalorder %s23, 1
        %s228 = scalar_select %p227, %s23, 1
        %p229 = scmp.lt.s32.totalorder %s226, 1
        %s230 = scalar_select %p229, %s226, 1
        %s231 = smul.addr %s228, 2
        %s232 = sadd.s32 %s230, %s231
        %s233 = smul.addr %s232, 4
        %s234 = scalar_lea.vmem %s3, %s233
        %s235 = smul.u32 2, %s24
        %s236 = smul.u32 2, %s24
        %p237 = scmp.lt.s32.totalorder %s23, 1
        %s238 = scalar_select %p237, %s23, 1
        %p239 = scmp.lt.s32.totalorder %s236, 1
        %s240 = scalar_select %p239, %s236, 1
        %s241 = smul.addr %s238, 2
        %s242 = sadd.s32 %s240, %s241
        %s243 = smul.addr %s242, 4
        %s244 = scalar_lea.vmem %s3, %s243
        %s245 = smul.u32 2, %s24
        %v246 = vld [vmem:[%s206] sm:$0xff]
        %s247 = sld [smem:[#allocation2]]
        %v248 = vstv %s247
        %v249 = vmul.f32 %v246, %v248
        %s250 = sld [smem:[#allocation2 + $0x1]]
        %v251 = vstv %s250
        %v252 = vmul.f32 %v246, %v251
        %v254 = vrot.slane %v252, 5
        %v255 = vrot.slane %v254, 4
        %v257 = vadd.f32 %v249, %v255
        %s258 = sld [smem:[#allocation2 + $0x2]]
        %v259 = vstv %s258
        %v260 = vmul.f32 %v246, %v259
        %v262 = vrot.slane %v260, 6
        %v263 = vrot.slane %v262, 4
        %v265 = vadd.f32 %v257, %v263
        %s266 = sld [smem:[#allocation2 + $0x3]]
        %v267 = vstv %s266
        %v268 = vmul.f32 %v246, %v267
        %v270 = vrot.slane %v268, 7
        %v271 = vrot.slane %v270, 4
        %v273 = vadd.f32 %v265, %v271
        %s274 = sld [smem:[#allocation5]]
        %v275 = vstv %s274
        %v276 = vadd.f32 %v273, %v275
        %v277 = vtanh.pop %v276
        %s278 = sld [smem:[#allocation2 + $0x4]]
        %v279 = vstv %s278
        %v280 = vmul.f32 %v246, %v279
        %s281 = sld [smem:[#allocation2 + $0x5]]
        %v282 = vstv %s281
        %v283 = vmul.f32 %v246, %v282
        %v285 = vrot.slane %v283, 5
        %v286 = vrot.slane %v285, 4
        %v288 = vadd.f32 %v280, %v286
        %s289 = sld [smem:[#allocation2 + $0x6]]
        %v290 = vstv %s289
        %v291 = vmul.f32 %v246, %v290
        %v293 = vrot.slane %v291, 6
        %v294 = vrot.slane %v293, 4
        %v296 = vadd.f32 %v288, %v294
        %s297 = sld [smem:[#allocation2 + $0x7]]
        %v298 = vstv %s297
        %v299 = vmul.f32 %v246, %v298
        %v301 = vrot.slane %v299, 7
        %v302 = vrot.slane %v301, 4
        %v304 = vadd.f32 %v296, %v302
        %s305 = sld [smem:[#allocation5 + $0x1]]
        %v306 = vstv %s305
        %v307 = vadd.f32 %v304, %v306
        %v308 = vtanh.pop %v307
        %s309 = sld [smem:[#allocation2 + $0x8]]
        %v310 = vstv %s309
        %v311 = vmul.f32 %v246, %v310
        %s312 = sld [smem:[#allocation2 + $0x9]]
        %v313 = vstv %s312
        %v314 = vmul.f32 %v246, %v313
        %v316 = vrot.slane %v314, 5
        %v317 = vrot.slane %v316, 4
        %v319 = vadd.f32 %v311, %v317
        %s320 = sld [smem:[#allocation2 + $0xa]]
        %v321 = vstv %s320
        %v322 = vmul.f32 %v246, %v321
        %v324 = vrot.slane %v322, 6
        %v325 = vrot.slane %v324, 4
        %v327 = vadd.f32 %v319, %v325
        %s328 = sld [smem:[#allocation2 + $0xb]]
        %v329 = vstv %s328
        %v330 = vmul.f32 %v246, %v329
        %v332 = vrot.slane %v330, 7
        %v333 = vrot.slane %v332, 4
        %v335 = vadd.f32 %v327, %v333
        %s336 = sld [smem:[#allocation5 + $0x2]]
        %v337 = vstv %s336
        %v338 = vadd.f32 %v335, %v337
        %v339 = vtanh.pop %v338
        %v341 = vperm.slane %v277, 0
        %v342 = vperm.slane %v277, 4
        %v346 = vperm.slane %v308, 0
        %v347 = vperm.slane %v308, 4
        %v351 = vperm.slane %v339, 0
        %v352 = vperm.slane %v339, 4
        %vm355 = vcmask 1040384
        %v356 = vsel %vm355, %v341, %v346
        %v357 = vsel %vm355, %v342, %v347
        %vm358 = vcmask 1041408
        %v359 = vsel %vm358, %v356, %v351
        %v360 = vsel %vm358, %v357, %v352
        %v363 = vrot.slane %v360, 4
        %vm364 = vcmask 1043456
        %v365 = vsel %vm364, %v359, %v363
        %367 = vst [vmem:[%s244] sm:$0x77] %v365
        %s368 = smul.u32 2, %s24
        %p369 = scmp.lt.s32.totalorder %s23, 1
        %s370 = scalar_select %p369, %s23, 1
        %p371 = scmp.lt.s32.totalorder %s368, 1
        %s372 = scalar_select %p371, %s368, 1
        %s373 = smul.addr %s370, 2
        %s374 = sadd.s32 %s372, %s373
        %s375 = smul.addr %s374, 4
        %s376 = scalar_lea.vmem %s3, %s375
        // Predicated region
        $region45: #{tpu_custom_call.1} parent=31 // pred_check
          %p377 = pneg %p121
        $region46: #{tpu_custom_call.1} parent=31 // pred_check_branch
          %379 = sbr.rel (%p377) target = $region48
        $region47: #{tpu_custom_call.1} parent=31 // pred_region
          %s380 = smul.u32 2, %s24
        $region48: #{tpu_custom_call.1} parent=31 // pred_fallthru
          _
      $region32: #{tpu_custom_call.1} parent=5 // pred_fallthru
        _
      %p381 = scmp.le.s32.totalorder 2, %s14
      // Predicated region
      $region49: #{tpu_custom_call.1} parent=5 // pred_check
        %p382 = pneg %p381
      $region50: #{tpu_custom_call.1} parent=5 // pred_check_branch
        %384 = sbr.rel (%p382) target = $region52
      $region51: #{tpu_custom_call.1} parent=5 // pred_region
        %s385 = ssub.s32 %s14, 2
        // Predicated region
        $region53: #{tpu_custom_call.1} parent=51 // pred_check
          %p386 = pneg %p127
        $region54: #{tpu_custom_call.1} parent=51 // pred_check_branch
          %388 = sbr.rel (%p386) target = $region56
        $region55: #{tpu_custom_call.1} parent=51 // pred_region
          %s389 = smul.u32 2, %s26
          %p390 = scmp.lt.s32.totalorder %s25, 1
          %s391 = scalar_select %p390, %s25, 1
          %p392 = scmp.lt.s32.totalorder %s389, 1
          %s393 = scalar_select %p392, %s389, 1
          %s394 = smul.addr %s391, 2
          %s395 = sadd.s32 %s393, %s394
          %s396 = smul.addr %s395, 4
          %s397 = scalar_lea.vmem %s3, %s396
        $region56: #{tpu_custom_call.1} parent=51 // pred_fallthru
          _
      $region52: #{tpu_custom_call.1} parent=5 // pred_fallthru
        _
    $region6: #{tpu_custom_call.1} parent=1 // loop_footer
      %s18 = sadd.s32 1, %s14
    $region7: #{tpu_custom_call.1} parent=1 // loop_footer_branch
      %13 = sbr.rel target = $region3
    $region8: #{tpu_custom_call.1} parent=1 // loop_exit
      _
    %398 = vsyncpa [#allocation3], 1
    %s399 = scalar_lea.sflag [#allocation3], 1
    %400 = vsyncpa %s399, 1
    %401 = vsyncpa [#allocation4], 1
    %s402 = scalar_lea.sflag [#allocation4], 1
    %403 = vsyncpa %s402, 1
    %404 = vsyncpa [#allocation6], 1

</llo_original>
